<compile_context>
chip_gen: v7x
topology: tpu7x:2x2x1
jax: 0.10.0
libtpu: 0.0.40
codegen_flags: <defaults>
</compile_context>

<pallas_src>
import functools

import jax
import jax.numpy as jnp
from jax.experimental import pallas as pl
from jax.experimental.pallas import tpu as pltpu

EPS = 1e-5
LANE = 128
_VMEM_LIMIT = 48 * 1024 * 1024  # well below physical VMEM on v5e/v6e/v7x


def _round_up(x, m):
    return (x + m - 1) // m * m


# ----------------------------- Pallas kernels ------------------------------ #

def _matmul_stats_kernel(p_ref, w_ref, y_ref, sum_ref, ssq_ref):
    """Tiled conv matmul + per-channel sum / sum-of-squares accumulation."""
    i = pl.program_id(0)

    @pl.when(i == 0)
    def _():
        sum_ref[...] = jnp.zeros_like(sum_ref)
        ssq_ref[...] = jnp.zeros_like(ssq_ref)

    y = jnp.dot(p_ref[...], w_ref[...], preferred_element_type=jnp.float32)
    y_ref[...] = y
    sum_ref[...] += jnp.sum(y, axis=0, keepdims=True)
    ssq_ref[...] += jnp.sum(y * y, axis=0, keepdims=True)


def _bn_relu_kernel(y_ref, scale_ref, shift_ref, o_ref):
    out = y_ref[...] * scale_ref[...] + shift_ref[...]
    o_ref[...] = jnp.maximum(out, 0.0).astype(o_ref.dtype)


def _bn_add_relu_kernel(y_ref, scale_ref, shift_ref, res_ref, o_ref):
    out = y_ref[...] * scale_ref[...] + shift_ref[...] + res_ref[...]
    o_ref[...] = jnp.maximum(out, 0.0).astype(o_ref.dtype)


def _conv_matmul_stats(p, w, tm):
    """p: (Mp, Kp) bf16, w: (Kp, Cp) bf16 -> y (Mp, Cp) f32, sum/ssq (1, Cp)."""
    mp, kp = p.shape
    cp = w.shape[1]
    return pl.pallas_call(
        _matmul_stats_kernel,
        out_shape=(jax.ShapeDtypeStruct((mp, cp), jnp.float32),
                   jax.ShapeDtypeStruct((1, cp), jnp.float32),
                   jax.ShapeDtypeStruct((1, cp), jnp.float32)),
        grid=(mp // tm,),
        in_specs=[pl.BlockSpec((tm, kp), lambda i: (i, 0)),
                  pl.BlockSpec((kp, cp), lambda i: (0, 0))],   # resident weights
        out_specs=(pl.BlockSpec((tm, cp), lambda i: (i, 0)),
                   pl.BlockSpec((1, cp), lambda i: (0, 0)),    # resident stats
                   pl.BlockSpec((1, cp), lambda i: (0, 0))),
        compiler_params=pltpu.CompilerParams(
            dimension_semantics=("arbitrary",),  # stats accumulate across M tiles
            vmem_limit_bytes=_VMEM_LIMIT),
    )(p, w)


def _bn_relu(y, scale, shift, tm, out_dtype):
    mp, cp = y.shape
    return pl.pallas_call(
        _bn_relu_kernel,
        out_shape=jax.ShapeDtypeStruct((mp, cp), out_dtype),
        grid=(mp // tm,),
        in_specs=[pl.BlockSpec((tm, cp), lambda i: (i, 0)),
                  pl.BlockSpec((1, cp), lambda i: (0, 0)),
                  pl.BlockSpec((1, cp), lambda i: (0, 0))],
        out_specs=pl.BlockSpec((tm, cp), lambda i: (i, 0)),
        compiler_params=pltpu.CompilerParams(
            dimension_semantics=("parallel",),
            vmem_limit_bytes=_VMEM_LIMIT),
    )(y, scale, shift)


def _bn_add_relu(y, scale, shift, res, tm, out_dtype):
    mp, cp = y.shape
    return pl.pallas_call(
        _bn_add_relu_kernel,
        out_shape=jax.ShapeDtypeStruct((mp, cp), out_dtype),
        grid=(mp // tm,),
        in_specs=[pl.BlockSpec((tm, cp), lambda i: (i, 0)),
                  pl.BlockSpec((1, cp), lambda i: (0, 0)),
                  pl.BlockSpec((1, cp), lambda i: (0, 0)),
                  pl.BlockSpec((tm, cp), lambda i: (i, 0))],
        out_specs=pl.BlockSpec((tm, cp), lambda i: (i, 0)),
        compiler_params=pltpu.CompilerParams(
            dimension_semantics=("parallel",),
            vmem_limit_bytes=_VMEM_LIMIT),
    )(y, scale, shift, res)


# ------------------------------ JAX glue ----------------------------------- #

def _im2col(x_nhwc, stride):
    """3x3, padding=1 patch extraction; rows = NHWC raster, cols = [ky,kx,c]."""
    n, h, w, c = x_nhwc.shape
    ho = (h + 2 - 3) // stride + 1
    wo = (w + 2 - 3) // stride + 1
    xp = jnp.pad(x_nhwc, ((0, 0), (1, 1), (1, 1), (0, 0)))
    cols = []
    for ky in range(3):
        for kx in range(3):
            cols.append(xp[:,
                           ky: ky + stride * (ho - 1) + 1: stride,
                           kx: kx + stride * (wo - 1) + 1: stride,
                           :])
    patches = jnp.concatenate(cols, axis=-1)            # (N, Ho, Wo, 9*C)
    return patches.reshape(n * ho * wo, 9 * c), (ho, wo)


def _weight_to_matrix(w_oihw):
    """(Cout, Cin, 3, 3) -> (9*Cin, Cout), rows ordered [ky, kx, cin]."""
    cout, cin, _, _ = w_oihw.shape
    return jnp.transpose(w_oihw, (2, 3, 1, 0)).reshape(9 * cin, cout)


def _pad2d(a, rows, cols):
    r, c = a.shape
    return jnp.pad(a, ((0, rows - r), (0, cols - c)))


def _shortcut(x_nhwc, planes, stride):
    n, h, w, c = x_nhwc.shape
    s = x_nhwc[:, ::2, ::2, :] if stride != 1 else x_nhwc
    if stride != 1 or c != planes:
        pb = (planes - c) // 2
        pa = planes - c - pb
        s = jnp.pad(s, ((0, 0), (0, 0), (0, 0), (pb, pa)))
    return s


def _fold_bn(sum_, ssq, gamma, beta, m_true, cpad):
    """Fold BN into one FMA: scale = g*rsqrt(var+eps), shift = b - mean*scale."""
    mean = sum_ / m_true                                    # (1, Cp)
    var = jnp.maximum(ssq / m_true - mean * mean, 0.0)      # one-pass, biased
    g = jnp.pad(gamma, (0, cpad - gamma.shape[0])).reshape(1, cpad)
    b = jnp.pad(beta, (0, cpad - beta.shape[0])).reshape(1, cpad)
    scale = g * jax.lax.rsqrt(var + EPS)
    shift = b - mean * scale
    return scale.astype(jnp.float32), shift.astype(jnp.float32)


@functools.partial(jax.jit, static_argnames=("stride", "tm"))
def basic_block_forward(x_nchw, w1, g1, b1, w2, g2, b2, stride, tm=512):
    """BasicBlock forward.  x_nchw: (N, Cin, H, W) float32.  Returns NCHW f32."""
    n, cin, h, w = x_nchw.shape
    mid = w1.shape[0]
    planes = w2.shape[0]
    x = jnp.transpose(x_nchw, (0, 2, 3, 1))                 # NHWC

    # ---- stage 1: conv1 -> bn1 -> relu ----
    p1, (ho, wo) = _im2col(x, stride)
    m = n * ho * wo
    tm_eff = min(tm, _round_up(m, 8))
    mp = _round_up(m, tm_eff)
    k1p = _round_up(9 * cin, LANE)
    cmid = _round_up(mid, LANE)
    p1p = _pad2d(p1, mp, k1p).astype(jnp.bfloat16)
    w1m = _pad2d(_weight_to_matrix(w1), k1p, cmid).astype(jnp.bfloat16)
    y1, s1, q1 = _conv_matmul_stats(p1p, w1m, tm_eff)
    sc1, sh1 = _fold_bn(s1, q1, g1, b1, m, cmid)
    h1 = _bn_relu(y1, sc1, sh1, tm_eff, jnp.bfloat16)       # bf16 halves h1 traffic
    h1 = h1[:m, :mid].reshape(n, ho, wo, mid)

    # ---- stage 2: conv2 -> bn2 -> (+shortcut) -> relu ----
    # TODO(synk): fuse conv1->conv2 in-VMEM (halo tiles / 9-shifted matmuls) to
    # eliminate the 9x im2col HBM duplication and this h1 HBM round trip.
    p2, _ = _im2col(h1, 1)
    k2p = _round_up(9 * mid, LANE)
    cpl = _round_up(planes, LANE)
    p2p = _pad2d(p2, mp, k2p).astype(jnp.bfloat16)
    w2m = _pad2d(_weight_to_matrix(w2), k2p, cpl).astype(jnp.bfloat16)
    y2, s2, q2 = _conv_matmul_stats(p2p, w2m, tm_eff)
    sc2, sh2 = _fold_bn(s2, q2, g2, b2, m, cpl)
    res = _shortcut(x, planes, stride).reshape(m, planes)
    resp = _pad2d(res, mp, cpl)                             # f32 residual
    out = _bn_add_relu(y2, sc2, sh2, resp, tm_eff, jnp.float32)
    out = out[:m, :planes].reshape(n, ho, wo, planes)
    return jnp.transpose(out, (0, 3, 1, 2))                 # back to NCHW


# --------------------------- pure-JAX reference ----------------------------- #

def _reference_forward(x, w1, g1, b1, w2, g2, b2, stride):
    planes = w2.shape[0]

    def conv(xx, ww, s):
        return jax.lax.conv_general_dilated(
            xx, ww, (s, s), ((1, 1), (1, 1)),
            dimension_numbers=("NCHW", "OIHW", "NCHW"))

    def bn(y, g, b):
        mu = jnp.mean(y, axis=(0, 2, 3), keepdims=True)
        v = jnp.mean((y - mu) ** 2, axis=(0, 2, 3), keepdims=True)
        return (y - mu) * jax.lax.rsqrt(v + EPS) * g.reshape(1, -1, 1, 1) \
            + b.reshape(1, -1, 1, 1)

    hh = jnp.maximum(bn(conv(x, w1, stride), g1, b1), 0.0)
    oo = bn(conv(hh, w2, 1), g2, b2)
    c = x.shape[1]
    sc = x[:, :, ::2, ::2] if stride != 1 else x
    if stride != 1 or c != planes:
        pb = (planes - c) // 2
        pa = planes - c - pb
        sc = jnp.pad(sc, ((0, 0), (pb, pa), (0, 0), (0, 0)))
    return jnp.maximum(oo + sc, 0.0)


# ---------------------------------- main ------------------------------------ #

if __name__ == "__main__":
    # BasicBlock(midplanes=8, inplanes=4, planes=8, stride=2) at small shapes.
    N, inplanes, H, W = 2, 4, 16, 16
    midplanes, planes, stride = 8, 8, 2

    key = jax.random.PRNGKey(0)
    kx, k1, k2, kg1, kb1, kg2, kb2 = jax.random.split(key, 7)

    x = jax.random.normal(kx, (N, inplanes, H, W), dtype=jnp.float32)
    w1 = jax.random.normal(k1, (midplanes, inplanes, 3, 3), dtype=jnp.float32) * 0.2
    w2 = jax.random.normal(k2, (planes, midplanes, 3, 3), dtype=jnp.float32) * 0.2
    g1 = 1.0 + 0.1 * jax.random.normal(kg1, (midplanes,), dtype=jnp.float32)
    b1 = 0.1 * jax.random.normal(kb1, (midplanes,), dtype=jnp.float32)
    g2 = 1.0 + 0.1 * jax.random.normal(kg2, (planes,), dtype=jnp.float32)
    b2 = 0.1 * jax.random.normal(kb2, (planes,), dtype=jnp.float32)

    out = basic_block_forward(x, w1, g1, b1, w2, g2, b2, stride=stride)
    out = jax.block_until_ready(out)

    ref = jax.block_until_ready(
        _reference_forward(x, w1, g1, b1, w2, g2, b2, stride))

    assert out.shape == (N, planes, H // stride, W // stride), out.shape
    # bf16 matmul inputs (f32 accumulation) vs full-f32 reference -> loose tol.
    err = float(jnp.max(jnp.abs(out - ref)))
    assert err < 1e-1, err

    print("KERNEL_OK")
</pallas_src>

<mosaic_0001>
module attributes {stable_mosaic.version = 11 : i64} {
  func.func @_matmul_stats_kernel(%arg0: i32, %arg1: memref<128x128xbf16, #tpu.memory_space<vmem>>, %arg2: memref<128x128xbf16, #tpu.memory_space<vmem>>, %arg3: memref<128x128xf32, #tpu.memory_space<vmem>>, %arg4: memref<1x128xf32, #tpu.memory_space<vmem>>, %arg5: memref<1x128xf32, #tpu.memory_space<vmem>>) attributes {dimension_semantics = [#tpu.dimension_semantics<arbitrary>], iteration_bounds = array<i64: 1>, scalar_prefetch = 0 : i64, scratch_operands = 0 : i64, tpu.core_type = #tpu.core_type<tc>, window_params = [{transform_indices = @transform_0, window_bounds = array<i64: 128, 128>}, {pipeline_mode = #tpu.pipeline_mode<synchronous>, transform_indices = @transform_1, window_bounds = array<i64: 128, 128>}, {transform_indices = @transform_2, window_bounds = array<i64: 128, 128>}, {pipeline_mode = #tpu.pipeline_mode<synchronous>, transform_indices = @transform_3, window_bounds = array<i64: 1, 128>}, {pipeline_mode = #tpu.pipeline_mode<synchronous>, transform_indices = @transform_4, window_bounds = array<i64: 1, 128>}]} {
    %c0_i32 = arith.constant 0 : i32
    %0 = arith.cmpi eq, %arg0, %c0_i32 : i32
    %1 = arith.extui %0 : i1 to i32
    %c0_i32_0 = arith.constant 0 : i32
    %2 = arith.cmpi ne, %1, %c0_i32_0 : i32
    scf.if %2 {
      %cst_16 = arith.constant 0.000000e+00 : f32
      %18 = vector.broadcast %cst_16 : f32 to vector<1x128xf32>
      %c0_17 = arith.constant 0 : index
      %c0_18 = arith.constant 0 : index
      %19 = vector.load %arg4[%c0_17, %c0_18] : memref<1x128xf32, #tpu.memory_space<vmem>>, vector<1x128xf32>
      tpu.vector_store %arg4[%c0_17, %c0_18], %18 {strides = array<i32>} : memref<1x128xf32, #tpu.memory_space<vmem>>, vector<1x128xf32>,
      %cst_19 = arith.constant 0.000000e+00 : f32
      %20 = vector.broadcast %cst_19 : f32 to vector<1x128xf32>
      %c0_20 = arith.constant 0 : index
      %c0_21 = arith.constant 0 : index
      %21 = vector.load %arg5[%c0_20, %c0_21] : memref<1x128xf32, #tpu.memory_space<vmem>>, vector<1x128xf32>
      tpu.vector_store %arg5[%c0_20, %c0_21], %20 {strides = array<i32>} : memref<1x128xf32, #tpu.memory_space<vmem>>, vector<1x128xf32>,
    } else {
    }
    %c0 = arith.constant 0 : index
    %c0_1 = arith.constant 0 : index
    %3 = vector.load %arg1[%c0, %c0_1] : memref<128x128xbf16, #tpu.memory_space<vmem>>, vector<128x128xbf16>
    %c0_2 = arith.constant 0 : index
    %c0_3 = arith.constant 0 : index
    %4 = vector.load %arg2[%c0_2, %c0_3] : memref<128x128xbf16, #tpu.memory_space<vmem>>, vector<128x128xbf16>
    %cst = arith.constant dense<0.000000e+00> : vector<128x128xf32>
    %5 = tpu.matmul %3, %4, %cst {dimension_numbers = #tpu.dot_dimension_numbers<[1], [0], [0], [1], [0, 0, 1, 1], [], []>} : vector<128x128xbf16>, vector<128x128xbf16>, vector<128x128xf32> -> vector<128x128xf32>
    %c0_4 = arith.constant 0 : index
    %c0_5 = arith.constant 0 : index
    %6 = vector.load %arg3[%c0_4, %c0_5] : memref<128x128xf32, #tpu.memory_space<vmem>>, vector<128x128xf32>
    tpu.vector_store %arg3[%c0_4, %c0_5], %5 {strides = array<i32>} : memref<128x128xf32, #tpu.memory_space<vmem>>, vector<128x128xf32>,
    %c0_6 = arith.constant 0 : index
    %c0_7 = arith.constant 0 : index
    %7 = vector.load %arg4[%c0_6, %c0_7] : memref<1x128xf32, #tpu.memory_space<vmem>>, vector<1x128xf32>
    %cst_8 = arith.constant dense<0.000000e+00> : vector<128xf32>
    %8 = vector.multi_reduction <add>, %5, %cst_8 [0] : vector<128x128xf32> to vector<128xf32>
    %9 = vector.shape_cast %8 : vector<128xf32> to vector<1x128xf32>
    %10 = arith.addf %7, %9 : vector<1x128xf32>
    %c0_9 = arith.constant 0 : index
    %c0_10 = arith.constant 0 : index
    %11 = vector.load %arg4[%c0_9, %c0_10] : memref<1x128xf32, #tpu.memory_space<vmem>>, vector<1x128xf32>
    tpu.vector_store %arg4[%c0_9, %c0_10], %10 {strides = array<i32>} : memref<1x128xf32, #tpu.memory_space<vmem>>, vector<1x128xf32>,
    %c0_11 = arith.constant 0 : index
    %c0_12 = arith.constant 0 : index
    %12 = vector.load %arg5[%c0_11, %c0_12] : memref<1x128xf32, #tpu.memory_space<vmem>>, vector<1x128xf32>
    %13 = arith.mulf %5, %5 : vector<128x128xf32>
    %cst_13 = arith.constant dense<0.000000e+00> : vector<128xf32>
    %14 = vector.multi_reduction <add>, %13, %cst_13 [0] : vector<128x128xf32> to vector<128xf32>
    %15 = vector.shape_cast %14 : vector<128xf32> to vector<1x128xf32>
    %16 = arith.addf %12, %15 : vector<1x128xf32>
    %c0_14 = arith.constant 0 : index
    %c0_15 = arith.constant 0 : index
    %17 = vector.load %arg5[%c0_14, %c0_15] : memref<1x128xf32, #tpu.memory_space<vmem>>, vector<1x128xf32>
    tpu.vector_store %arg5[%c0_14, %c0_15], %16 {strides = array<i32>} : memref<1x128xf32, #tpu.memory_space<vmem>>, vector<1x128xf32>,
    return
  }
  func.func @transform_0(%arg0: i32) -> (i32, i32) {
    %c0_i32 = arith.constant 0 : i32
    %c0_i32_0 = arith.constant 0 : i32
    return %arg0, %c0_i32 : i32, i32
  }
  func.func @transform_1(%arg0: i32) -> (i32, i32) {
    %c0_i32 = arith.constant 0 : i32
    %c0_i32_0 = arith.constant 0 : i32
    %c0_i32_1 = arith.constant 0 : i32
    return %c0_i32, %c0_i32_0 : i32, i32
  }
  func.func @transform_2(%arg0: i32) -> (i32, i32) {
    %c0_i32 = arith.constant 0 : i32
    %c0_i32_0 = arith.constant 0 : i32
    return %arg0, %c0_i32 : i32, i32
  }
  func.func @transform_3(%arg0: i32) -> (i32, i32) {
    %c0_i32 = arith.constant 0 : i32
    %c0_i32_0 = arith.constant 0 : i32
    %c0_i32_1 = arith.constant 0 : i32
    return %c0_i32, %c0_i32_0 : i32, i32
  }
  func.func @transform_4(%arg0: i32) -> (i32, i32) {
    %c0_i32 = arith.constant 0 : i32
    %c0_i32_0 = arith.constant 0 : i32
    %c0_i32_1 = arith.constant 0 : i32
    return %c0_i32, %c0_i32_0 : i32, i32
  }
}

module attributes {stable_mosaic.version = 11 : i64} {
  func.func @_bn_relu_kernel(%arg0: i32, %arg1: memref<128x128xf32, #tpu.memory_space<vmem>>, %arg2: memref<1x128xf32, #tpu.memory_space<vmem>>, %arg3: memref<1x128xf32, #tpu.memory_space<vmem>>, %arg4: memref<128x128xbf16, #tpu.memory_space<vmem>>) attributes {dimension_semantics = [#tpu.dimension_semantics<parallel>], iteration_bounds = array<i64: 1>, scalar_prefetch = 0 : i64, scratch_operands = 0 : i64, tpu.core_type = #tpu.core_type<tc>, window_params = [{transform_indices = @transform_0, window_bounds = array<i64: 128, 128>}, {pipeline_mode = #tpu.pipeline_mode<synchronous>, transform_indices = @transform_1, window_bounds = array<i64: 1, 128>}, {pipeline_mode = #tpu.pipeline_mode<synchronous>, transform_indices = @transform_2, window_bounds = array<i64: 1, 128>}, {transform_indices = @transform_3, window_bounds = array<i64: 128, 128>}]} {
    %c0 = arith.constant 0 : index
    %c0_0 = arith.constant 0 : index
    %0 = vector.load %arg1[%c0, %c0_0] : memref<128x128xf32, #tpu.memory_space<vmem>>, vector<128x128xf32>
    %c0_1 = arith.constant 0 : index
    %c0_2 = arith.constant 0 : index
    %1 = vector.load %arg2[%c0_1, %c0_2] : memref<1x128xf32, #tpu.memory_space<vmem>>, vector<1x128xf32>
    %2 = vector.broadcast %1 : vector<1x128xf32> to vector<128x128xf32>
    %3 = arith.mulf %0, %2 : vector<128x128xf32>
    %c0_3 = arith.constant 0 : index
    %c0_4 = arith.constant 0 : index
    %4 = vector.load %arg3[%c0_3, %c0_4] : memref<1x128xf32, #tpu.memory_space<vmem>>, vector<1x128xf32>
    %5 = vector.broadcast %4 : vector<1x128xf32> to vector<128x128xf32>
    %6 = arith.addf %3, %5 : vector<128x128xf32>
    %cst = arith.constant 0.000000e+00 : f32
    %7 = vector.broadcast %cst : f32 to vector<128x128xf32>
    %8 = arith.maximumf %6, %7 : vector<128x128xf32>
    %9 = arith.truncf %8 : vector<128x128xf32> to vector<128x128xbf16>
    %c0_5 = arith.constant 0 : index
    %c0_6 = arith.constant 0 : index
    %10 = vector.load %arg4[%c0_5, %c0_6] : memref<128x128xbf16, #tpu.memory_space<vmem>>, vector<128x128xbf16>
    tpu.vector_store %arg4[%c0_5, %c0_6], %9 {strides = array<i32>} : memref<128x128xbf16, #tpu.memory_space<vmem>>, vector<128x128xbf16>,
    return
  }
  func.func @transform_0(%arg0: i32) -> (i32, i32) {
    %c0_i32 = arith.constant 0 : i32
    %c0_i32_0 = arith.constant 0 : i32
    return %arg0, %c0_i32 : i32, i32
  }
  func.func @transform_1(%arg0: i32) -> (i32, i32) {
    %c0_i32 = arith.constant 0 : i32
    %c0_i32_0 = arith.constant 0 : i32
    %c0_i32_1 = arith.constant 0 : i32
    return %c0_i32, %c0_i32_0 : i32, i32
  }
  func.func @transform_2(%arg0: i32) -> (i32, i32) {
    %c0_i32 = arith.constant 0 : i32
    %c0_i32_0 = arith.constant 0 : i32
    %c0_i32_1 = arith.constant 0 : i32
    return %c0_i32, %c0_i32_0 : i32, i32
  }
  func.func @transform_3(%arg0: i32) -> (i32, i32) {
    %c0_i32 = arith.constant 0 : i32
    %c0_i32_0 = arith.constant 0 : i32
    return %arg0, %c0_i32 : i32, i32
  }
}

module attributes {stable_mosaic.version = 11 : i64} {
  func.func @_bn_add_relu_kernel(%arg0: i32, %arg1: memref<128x128xf32, #tpu.memory_space<vmem>>, %arg2: memref<1x128xf32, #tpu.memory_space<vmem>>, %arg3: memref<1x128xf32, #tpu.memory_space<vmem>>, %arg4: memref<128x128xf32, #tpu.memory_space<vmem>>, %arg5: memref<128x128xf32, #tpu.memory_space<vmem>>) attributes {dimension_semantics = [#tpu.dimension_semantics<parallel>], iteration_bounds = array<i64: 1>, scalar_prefetch = 0 : i64, scratch_operands = 0 : i64, tpu.core_type = #tpu.core_type<tc>, window_params = [{transform_indices = @transform_0, window_bounds = array<i64: 128, 128>}, {pipeline_mode = #tpu.pipeline_mode<synchronous>, transform_indices = @transform_1, window_bounds = array<i64: 1, 128>}, {pipeline_mode = #tpu.pipeline_mode<synchronous>, transform_indices = @transform_2, window_bounds = array<i64: 1, 128>}, {transform_indices = @transform_3, window_bounds = array<i64: 128, 128>}, {transform_indices = @transform_4, window_bounds = array<i64: 128, 128>}]} {
    %c0 = arith.constant 0 : index
    %c0_0 = arith.constant 0 : index
    %0 = vector.load %arg1[%c0, %c0_0] : memref<128x128xf32, #tpu.memory_space<vmem>>, vector<128x128xf32>
    %c0_1 = arith.constant 0 : index
    %c0_2 = arith.constant 0 : index
    %1 = vector.load %arg2[%c0_1, %c0_2] : memref<1x128xf32, #tpu.memory_space<vmem>>, vector<1x128xf32>
    %2 = vector.broadcast %1 : vector<1x128xf32> to vector<128x128xf32>
    %3 = arith.mulf %0, %2 : vector<128x128xf32>
    %c0_3 = arith.constant 0 : index
    %c0_4 = arith.constant 0 : index
    %4 = vector.load %arg3[%c0_3, %c0_4] : memref<1x128xf32, #tpu.memory_space<vmem>>, vector<1x128xf32>
    %5 = vector.broadcast %4 : vector<1x128xf32> to vector<128x128xf32>
    %6 = arith.addf %3, %5 : vector<128x128xf32>
    %c0_5 = arith.constant 0 : index
    %c0_6 = arith.constant 0 : index
    %7 = vector.load %arg4[%c0_5, %c0_6] : memref<128x128xf32, #tpu.memory_space<vmem>>, vector<128x128xf32>
    %8 = arith.addf %6, %7 : vector<128x128xf32>
    %cst = arith.constant 0.000000e+00 : f32
    %9 = vector.broadcast %cst : f32 to vector<128x128xf32>
    %10 = arith.maximumf %8, %9 : vector<128x128xf32>
    %c0_7 = arith.constant 0 : index
    %c0_8 = arith.constant 0 : index
    %11 = vector.load %arg5[%c0_7, %c0_8] : memref<128x128xf32, #tpu.memory_space<vmem>>, vector<128x128xf32>
    tpu.vector_store %arg5[%c0_7, %c0_8], %10 {strides = array<i32>} : memref<128x128xf32, #tpu.memory_space<vmem>>, vector<128x128xf32>,
    return
  }
  func.func @transform_0(%arg0: i32) -> (i32, i32) {
    %c0_i32 = arith.constant 0 : i32
    %c0_i32_0 = arith.constant 0 : i32
    return %arg0, %c0_i32 : i32, i32
  }
  func.func @transform_1(%arg0: i32) -> (i32, i32) {
    %c0_i32 = arith.constant 0 : i32
    %c0_i32_0 = arith.constant 0 : i32
    %c0_i32_1 = arith.constant 0 : i32
    return %c0_i32, %c0_i32_0 : i32, i32
  }
  func.func @transform_2(%arg0: i32) -> (i32, i32) {
    %c0_i32 = arith.constant 0 : i32
    %c0_i32_0 = arith.constant 0 : i32
    %c0_i32_1 = arith.constant 0 : i32
    return %c0_i32, %c0_i32_0 : i32, i32
  }
  func.func @transform_3(%arg0: i32) -> (i32, i32) {
    %c0_i32 = arith.constant 0 : i32
    %c0_i32_0 = arith.constant 0 : i32
    return %arg0, %c0_i32 : i32, i32
  }
  func.func @transform_4(%arg0: i32) -> (i32, i32) {
    %c0_i32 = arith.constant 0 : i32
    %c0_i32_0 = arith.constant 0 : i32
    return %arg0, %c0_i32 : i32, i32
  }
}

</mosaic_0001>

<llo_original>
// kernel: basic_block_forward.5
$region0: #{basic_block_forward.5}
  #allocation0 [shape = 'u32[]', space=smem, size = 0x4, offset = 0x4, fixed_abs, tag = 'smem constant byte address 0x4 - core index']
  #allocation1 [shape = 'u32[144,128]{1,0:T(1,128)}', space=vmem, size = 0x12000, scoped, tag = 'internal scratch']
  %s0 = inlined_call_operand.vmem [shape: f32[128,128], index: 0, kind: input, shape index: {}]
  %s1 = inlined_call_operand.vmem [shape: f32[1,128], index: 1, kind: input, shape index: {}]
  %s2 = inlined_call_operand.vmem [shape: f32[1,128], index: 2, kind: input, shape index: {}]
  %s3 = inlined_call_operand.vmem [shape: bf16[128,128], index: 3, kind: output, shape index: {}]
  %s4 = sld [smem:[#allocation0]]
  $region22: #{basic_block_forward.5} parent=0
    _
  %s6 = ssub.s32 1, %s4
  %s7 = scalar_select 0, %s6, %s4
  // Predicated region
  $region2: #{basic_block_forward.5} parent=0 // pred_check
    _
  $region3: #{basic_block_forward.5} parent=0 // pred_check_branch
    %9 = sbr.rel (0) target = $region5
  $region4: #{basic_block_forward.5} parent=0 // pred_region
    _
  $region5: #{basic_block_forward.5} parent=0 // pred_fallthru
    _
  // Predicated region
  $region6: #{basic_block_forward.5} parent=0 // pred_check
    _
  $region7: #{basic_block_forward.5} parent=0 // pred_check_branch
    %11 = sbr.rel (0) target = $region9
  $region8: #{basic_block_forward.5} parent=0 // pred_region
    _
  $region9: #{basic_block_forward.5} parent=0 // pred_fallthru
    _
  // Predicated region
  $region10: #{basic_block_forward.5} parent=0 // pred_check
    _
  $region11: #{basic_block_forward.5} parent=0 // pred_check_branch
    %13 = sbr.rel (0) target = $region13
  $region12: #{basic_block_forward.5} parent=0 // pred_region
    _
  $region13: #{basic_block_forward.5} parent=0 // pred_fallthru
    _
  %v14 = vld [vmem:[%s0] sm:$0xff]
  %v15 = vld [vmem:[%s0 + $0x8] sm:$0xff]
  %v16 = vld [vmem:[%s0 + $0x10] sm:$0xff]
  %v17 = vld [vmem:[%s0 + $0x18] sm:$0xff]
  %v18 = vld [vmem:[%s0 + $0x20] sm:$0xff]
  %v19 = vld [vmem:[%s0 + $0x28] sm:$0xff]
  %v20 = vld [vmem:[%s0 + $0x30] sm:$0xff]
  %v21 = vld [vmem:[%s0 + $0x38] sm:$0xff]
  %v22 = vld [vmem:[%s0 + $0x40] sm:$0xff]
  %v23 = vld [vmem:[%s0 + $0x48] sm:$0xff]
  %v24 = vld [vmem:[%s0 + $0x50] sm:$0xff]
  %v25 = vld [vmem:[%s0 + $0x58] sm:$0xff]
  %v26 = vld [vmem:[%s0 + $0x60] sm:$0xff]
  %v27 = vld [vmem:[%s0 + $0x68] sm:$0xff]
  %v28 = vld [vmem:[%s0 + $0x70] sm:$0xff]
  %v29 = vld [vmem:[%s0 + $0x78] sm:$0xff]
  %v30 = vld [vmem:[%s1] sm:$0x1]
  %v32 = vlaneseq
  %v33 = vshrl.u32 %v32, 7
  %v34 = vsub.s32 0, %v33
  %v35 = vrot.slane %v30, %v34
  %v37 = vmul.f32 %v14, %v35
  %v38 = vmul.f32 %v15, %v35
  %v39 = vmul.f32 %v16, %v35
  %v40 = vmul.f32 %v17, %v35
  %v41 = vmul.f32 %v18, %v35
  %v42 = vmul.f32 %v19, %v35
  %v43 = vmul.f32 %v20, %v35
  %v44 = vmul.f32 %v21, %v35
  %v45 = vmul.f32 %v22, %v35
  %v46 = vmul.f32 %v23, %v35
  %v47 = vmul.f32 %v24, %v35
  %v48 = vmul.f32 %v25, %v35
  %v49 = vmul.f32 %v26, %v35
  %v50 = vmul.f32 %v27, %v35
  %v51 = vmul.f32 %v28, %v35
  %v52 = vmul.f32 %v29, %v35
  %v53 = vld [vmem:[%s2] sm:$0x1]
  %v55 = vlaneseq
  %v56 = vshrl.u32 %v55, 7
  %v57 = vsub.s32 0, %v56
  %v58 = vrot.slane %v53, %v57
  %v60 = vadd.f32 %v37, %v58
  %v61 = vadd.f32 %v38, %v58
  %v62 = vadd.f32 %v39, %v58
  %v63 = vadd.f32 %v40, %v58
  %v64 = vadd.f32 %v41, %v58
  %v65 = vadd.f32 %v42, %v58
  %v66 = vadd.f32 %v43, %v58
  %v67 = vadd.f32 %v44, %v58
  %v68 = vadd.f32 %v45, %v58
  %v69 = vadd.f32 %v46, %v58
  %v70 = vadd.f32 %v47, %v58
  %v71 = vadd.f32 %v48, %v58
  %v72 = vadd.f32 %v49, %v58
  %v73 = vadd.f32 %v50, %v58
  %v74 = vadd.f32 %v51, %v58
  %v75 = vadd.f32 %v52, %v58
  %v76 = vmax.f32 %v60, 0.0
  %v77 = vmax.f32 %v61, 0.0
  %v78 = vmax.f32 %v62, 0.0
  %v79 = vmax.f32 %v63, 0.0
  %v80 = vmax.f32 %v64, 0.0
  %v81 = vmax.f32 %v65, 0.0
  %v82 = vmax.f32 %v66, 0.0
  %v83 = vmax.f32 %v67, 0.0
  %v84 = vmax.f32 %v68, 0.0
  %v85 = vmax.f32 %v69, 0.0
  %v86 = vmax.f32 %v70, 0.0
  %v87 = vmax.f32 %v71, 0.0
  %v88 = vmax.f32 %v72, 0.0
  %v89 = vmax.f32 %v73, 0.0
  %v90 = vmax.f32 %v74, 0.0
  %v91 = vmax.f32 %v75, 0.0
  %v92 = vpack.c.bf16 %v77, %v76
  %v93 = vpack.c.bf16 %v79, %v78
  %v94 = vpack.c.bf16 %v81, %v80
  %v95 = vpack.c.bf16 %v83, %v82
  %v96 = vpack.c.bf16 %v85, %v84
  %v97 = vpack.c.bf16 %v87, %v86
  %v98 = vpack.c.bf16 %v89, %v88
  %v99 = vpack.c.bf16 %v91, %v90
  %v108 = vunpack.c.l.b16 %v92
  %v109 = vunpack.c.h.b16 %v92
  %v110 = vunpack.c.l.b16 %v93
  %v111 = vunpack.c.h.b16 %v93
  %v112 = vunpack.c.l.b16 %v94
  %v113 = vunpack.c.h.b16 %v94
  %v114 = vunpack.c.l.b16 %v95
  %v115 = vunpack.c.h.b16 %v95
  %v116 = vunpack.c.l.b16 %v96
  %v117 = vunpack.c.h.b16 %v96
  %v118 = vunpack.c.l.b16 %v97
  %v119 = vunpack.c.h.b16 %v97
  %v120 = vunpack.c.l.b16 %v98
  %v121 = vunpack.c.h.b16 %v98
  %v122 = vunpack.c.l.b16 %v99
  %v123 = vunpack.c.h.b16 %v99
  %v124 = vpack.c.b16 %v108, %v108
  %v125 = vpack.c.b16 %v109, %v109
  %v126 = vpack.c.b16 %v110, %v110
  %v127 = vpack.c.b16 %v111, %v111
  %v128 = vpack.c.b16 %v112, %v112
  %v129 = vpack.c.b16 %v113, %v113
  %v130 = vpack.c.b16 %v114, %v114
  %v131 = vpack.c.b16 %v115, %v115
  %v132 = vpack.c.b16 %v116, %v116
  %v133 = vpack.c.b16 %v117, %v117
  %v134 = vpack.c.b16 %v118, %v118
  %v135 = vpack.c.b16 %v119, %v119
  %v136 = vpack.c.b16 %v120, %v120
  %v137 = vpack.c.b16 %v121, %v121
  %v138 = vpack.c.b16 %v122, %v122
  %v139 = vpack.c.b16 %v123, %v123
  %156 = vst [vmem:[%s3] sm:$0xf] %v124
  %157 = vst [vmem:[%s3 + $0x4] sm:$0xf] %v125
  %158 = vst [vmem:[%s3 + $0x8] sm:$0xf] %v126
  %159 = vst [vmem:[%s3 + $0xc] sm:$0xf] %v127
  %160 = vst [vmem:[%s3 + $0x10] sm:$0xf] %v128
  %161 = vst [vmem:[%s3 + $0x14] sm:$0xf] %v129
  %162 = vst [vmem:[%s3 + $0x18] sm:$0xf] %v130
  %163 = vst [vmem:[%s3 + $0x1c] sm:$0xf] %v131
  %164 = vst [vmem:[%s3 + $0x20] sm:$0xf] %v132
  %165 = vst [vmem:[%s3 + $0x24] sm:$0xf] %v133
  %166 = vst [vmem:[%s3 + $0x28] sm:$0xf] %v134
  %167 = vst [vmem:[%s3 + $0x2c] sm:$0xf] %v135
  %168 = vst [vmem:[%s3 + $0x30] sm:$0xf] %v136
  %169 = vst [vmem:[%s3 + $0x34] sm:$0xf] %v137
  %170 = vst [vmem:[%s3 + $0x38] sm:$0xf] %v138
  %171 = vst [vmem:[%s3 + $0x3c] sm:$0xf] %v139
  // Predicated region
  $region14: #{basic_block_forward.5} parent=0 // pred_check
    _
  $region15: #{basic_block_forward.5} parent=0 // pred_check_branch
    %173 = sbr.rel (0) target = $region17
  $region16: #{basic_block_forward.5} parent=0 // pred_region
    _
  $region17: #{basic_block_forward.5} parent=0 // pred_fallthru
    _
  // Predicated region
  $region18: #{basic_block_forward.5} parent=0 // pred_check
    _
  $region19: #{basic_block_forward.5} parent=0 // pred_check_branch
    %175 = sbr.rel (0) target = $region21
  $region20: #{basic_block_forward.5} parent=0 // pred_region
    _
  $region21: #{basic_block_forward.5} parent=0 // pred_fallthru
    _

// kernel: basic_block_forward.4
$region0: #{basic_block_forward.4}
  #allocation0 [shape = 'u32[]', space=smem, size = 0x4, offset = 0x4, fixed_abs, tag = 'smem constant byte address 0x4 - core index']
  #allocation1 [shape = 'u32[144,128]{1,0:T(1,128)}', space=vmem, size = 0x12000, scoped, tag = 'internal scratch']
  %s0 = inlined_call_operand.vmem [shape: bf16[128,128], index: 0, kind: input, shape index: {}]
  %s1 = inlined_call_operand.vmem [shape: bf16[128,128], index: 1, kind: input, shape index: {}]
  %s2 = inlined_call_operand.vmem [shape: f32[128,128], index: 2, kind: output, shape index: {0}]
  %s3 = inlined_call_operand.vmem [shape: f32[1,128], index: 3, kind: output, shape index: {1}]
  %s4 = inlined_call_operand.vmem [shape: f32[1,128], index: 4, kind: output, shape index: {2}]
  %5 = xla_tuple %s2, %s3, %s4
  %s6 = sld [smem:[#allocation0]]
  $region38: #{basic_block_forward.4} parent=0
    _
  %s8 = ssub.s32 1, %s6
  %s9 = scalar_select 0, %s8, %s6
  // Predicated region
  $region2: #{basic_block_forward.4} parent=0 // pred_check
    _
  $region3: #{basic_block_forward.4} parent=0 // pred_check_branch
    %11 = sbr.rel (0) target = $region5
  $region4: #{basic_block_forward.4} parent=0 // pred_region
    _
  $region5: #{basic_block_forward.4} parent=0 // pred_fallthru
    _
  // Predicated region
  $region6: #{basic_block_forward.4} parent=0 // pred_check
    _
  $region7: #{basic_block_forward.4} parent=0 // pred_check_branch
    %13 = sbr.rel (0) target = $region9
  $region8: #{basic_block_forward.4} parent=0 // pred_region
    _
  $region9: #{basic_block_forward.4} parent=0 // pred_fallthru
    _
  %p15 = scmp.eq.s32.totalorder 0, 0
  // Predicated region
  $region10: #{basic_block_forward.4} parent=0 // pred_check
    %p16 = pneg %p15
  $region11: #{basic_block_forward.4} parent=0 // pred_check_branch
    %18 = sbr.rel (%p16) target = $region13
  $region12: #{basic_block_forward.4} parent=0 // pred_region
    %19 = vst [vmem:[%s3] sm:$0x1] 0.0
    %20 = vst [vmem:[%s4] sm:$0x1] 0.0
  $region13: #{basic_block_forward.4} parent=0 // pred_fallthru
    _
  %v21 = vld [vmem:[%s0] sm:$0xf]
  %v22 = vld [vmem:[%s0 + $0x4] sm:$0xf]
  %v23 = vld [vmem:[%s0 + $0x8] sm:$0xf]
  %v24 = vld [vmem:[%s0 + $0xc] sm:$0xf]
  %v25 = vld [vmem:[%s0 + $0x10] sm:$0xf]
  %v26 = vld [vmem:[%s0 + $0x14] sm:$0xf]
  %v27 = vld [vmem:[%s0 + $0x18] sm:$0xf]
  %v28 = vld [vmem:[%s0 + $0x1c] sm:$0xf]
  %v29 = vld [vmem:[%s0 + $0x20] sm:$0xf]
  %v30 = vld [vmem:[%s0 + $0x24] sm:$0xf]
  %v31 = vld [vmem:[%s0 + $0x28] sm:$0xf]
  %v32 = vld [vmem:[%s0 + $0x2c] sm:$0xf]
  %v33 = vld [vmem:[%s0 + $0x30] sm:$0xf]
  %v34 = vld [vmem:[%s0 + $0x34] sm:$0xf]
  %v35 = vld [vmem:[%s0 + $0x38] sm:$0xf]
  %v36 = vld [vmem:[%s0 + $0x3c] sm:$0xf]
  %v37 = vld [vmem:[%s1] sm:$0xf]
  %v38 = vld [vmem:[%s1 + $0x4] sm:$0xf]
  %v39 = vld [vmem:[%s1 + $0x8] sm:$0xf]
  %v40 = vld [vmem:[%s1 + $0xc] sm:$0xf]
  %v41 = vld [vmem:[%s1 + $0x10] sm:$0xf]
  %v42 = vld [vmem:[%s1 + $0x14] sm:$0xf]
  %v43 = vld [vmem:[%s1 + $0x18] sm:$0xf]
  %v44 = vld [vmem:[%s1 + $0x1c] sm:$0xf]
  %v45 = vld [vmem:[%s1 + $0x20] sm:$0xf]
  %v46 = vld [vmem:[%s1 + $0x24] sm:$0xf]
  %v47 = vld [vmem:[%s1 + $0x28] sm:$0xf]
  %v48 = vld [vmem:[%s1 + $0x2c] sm:$0xf]
  %v49 = vld [vmem:[%s1 + $0x30] sm:$0xf]
  %v50 = vld [vmem:[%s1 + $0x34] sm:$0xf]
  %v51 = vld [vmem:[%s1 + $0x38] sm:$0xf]
  %v52 = vld [vmem:[%s1 + $0x3c] sm:$0xf]
  %v69 = vunpack.c.l.b16 %v21
  %v70 = vunpack.c.l.b16 %v22
  %v71 = vunpack.c.l.b16 %v23
  %v72 = vunpack.c.l.b16 %v24
  %v73 = vunpack.c.l.b16 %v25
  %v74 = vunpack.c.l.b16 %v26
  %v75 = vunpack.c.l.b16 %v27
  %v76 = vunpack.c.l.b16 %v28
  %v77 = vunpack.c.l.b16 %v29
  %v78 = vunpack.c.l.b16 %v30
  %v79 = vunpack.c.l.b16 %v31
  %v80 = vunpack.c.l.b16 %v32
  %v81 = vunpack.c.l.b16 %v33
  %v82 = vunpack.c.l.b16 %v34
  %v83 = vunpack.c.l.b16 %v35
  %v84 = vunpack.c.l.b16 %v36
  %v85 = vpack.c.b16 %v70, %v69
  %v86 = vpack.c.b16 %v72, %v71
  %v87 = vpack.c.b16 %v74, %v73
  %v88 = vpack.c.b16 %v76, %v75
  %v89 = vpack.c.b16 %v78, %v77
  %v90 = vpack.c.b16 %v80, %v79
  %v91 = vpack.c.b16 %v82, %v81
  %v92 = vpack.c.b16 %v84, %v83
  %v117 = vunpack.c.l.b16 %v37
  %v118 = vunpack.c.l.b16 %v38
  %v119 = vunpack.c.l.b16 %v39
  %v120 = vunpack.c.l.b16 %v40
  %v121 = vunpack.c.l.b16 %v41
  %v122 = vunpack.c.l.b16 %v42
  %v123 = vunpack.c.l.b16 %v43
  %v124 = vunpack.c.l.b16 %v44
  %v125 = vunpack.c.l.b16 %v45
  %v126 = vunpack.c.l.b16 %v46
  %v127 = vunpack.c.l.b16 %v47
  %v128 = vunpack.c.l.b16 %v48
  %v129 = vunpack.c.l.b16 %v49
  %v130 = vunpack.c.l.b16 %v50
  %v131 = vunpack.c.l.b16 %v51
  %v132 = vunpack.c.l.b16 %v52
  %v133 = vpack.c.b16 %v118, %v117
  %v134 = vpack.c.b16 %v120, %v119
  %v135 = vpack.c.b16 %v122, %v121
  %v136 = vpack.c.b16 %v124, %v123
  %v137 = vpack.c.b16 %v126, %v125
  %v138 = vpack.c.b16 %v128, %v127
  %v139 = vpack.c.b16 %v130, %v129
  %v140 = vpack.c.b16 %v132, %v131
  %149 = vmatprep.subr.bf16.mxu0 0
  %150 = vmatpush1.bf16.msra.mxu0 %v133
  %151 = vmatprep.subr.bf16.mxu0 0
  %152 = vmatpush1.bf16.msra.mxu0 %v134
  %153 = vmatprep.subr.bf16.mxu0 0
  %154 = vmatpush1.bf16.msra.mxu0 %v135
  %155 = vmatprep.subr.bf16.mxu0 0
  %156 = vmatpush1.bf16.msra.mxu0 %v136
  %157 = vmatprep.subr.bf16.mxu0 0
  %158 = vmatpush1.bf16.msra.mxu0 %v137
  %159 = vmatprep.subr.bf16.mxu0 0
  %160 = vmatpush1.bf16.msra.mxu0 %v138
  %161 = vmatprep.subr.bf16.mxu0 0
  %162 = vmatpush1.bf16.msra.mxu0 %v139
  %163 = vmatprep.subr.bf16.mxu0 0
  %164 = vmatpush1.bf16.msra.mxu0 %v140
  %165 = vmatprep.subr.bf16.mxu0 0
  %166 = vmatpush1.bf16.msra.mxu0 0
  %167 = vmatprep.subr.bf16.mxu0 0
  %168 = vmatpush1.bf16.msra.mxu0 0
  %169 = vmatprep.subr.bf16.mxu0 0
  %170 = vmatpush1.bf16.msra.mxu0 0
  %171 = vmatprep.subr.bf16.mxu0 0
  %172 = vmatpush1.bf16.msra.mxu0 0
  %173 = vmatprep.subr.bf16.mxu0 0
  %174 = vmatpush1.bf16.msra.mxu0 0
  %175 = vmatprep.subr.bf16.mxu0 0
  %176 = vmatpush1.bf16.msra.mxu0 0
  %177 = vmatprep.subr.bf16.mxu0 0
  %178 = vmatpush1.bf16.msra.mxu0 0
  %179 = vmatprep.subr.bf16.mxu0 0
  %180 = vmatpush1.bf16.msra.mxu0 0
  %181 = vmatprep.mubr.bf16.mxu0 0
  %182 = vmatmul.mubr.bf16.gmra.mrb[0].mxu0 %v85
  %v183 = vpop.f32.mrb[0].mxu0
  %v184 = vadd.f32 0.0, %v183
  %v185 = vpop.f32.mrb[0].mxu0
  %v186 = vpop.f32.mrb[0].mxu0
  %v187 = vadd.f32 0.0, %v186
  %v188 = vpop.f32.mrb[0].mxu0
  %189 = vmatprep.mubr.bf16.mxu0 0
  %190 = vmatmul.mubr.bf16.gmra.mrb[0].mxu0 %v86
  %v191 = vpop.f32.mrb[0].mxu0
  %v192 = vadd.f32 0.0, %v191
  %v193 = vpop.f32.mrb[0].mxu0
  %v194 = vpop.f32.mrb[0].mxu0
  %v195 = vadd.f32 0.0, %v194
  %v196 = vpop.f32.mrb[0].mxu0
  %197 = vmatprep.mubr.bf16.mxu0 0
  %198 = vmatmul.mubr.bf16.gmra.mrb[0].mxu0 %v87
  %v199 = vpop.f32.mrb[0].mxu0
  %v200 = vadd.f32 0.0, %v199
  %v201 = vpop.f32.mrb[0].mxu0
  %v202 = vpop.f32.mrb[0].mxu0
  %v203 = vadd.f32 0.0, %v202
  %v204 = vpop.f32.mrb[0].mxu0
  %205 = vmatprep.mubr.bf16.mxu0 0
  %206 = vmatmul.mubr.bf16.gmra.mrb[0].mxu0 %v88
  %v207 = vpop.f32.mrb[0].mxu0
  %v208 = vadd.f32 0.0, %v207
  %v209 = vpop.f32.mrb[0].mxu0
  %v210 = vpop.f32.mrb[0].mxu0
  %v211 = vadd.f32 0.0, %v210
  %v212 = vpop.f32.mrb[0].mxu0
  %213 = vmatprep.mubr.bf16.mxu0 0
  %214 = vmatmul.mubr.bf16.gmra.mrb[0].mxu0 %v89
  %v215 = vpop.f32.mrb[0].mxu0
  %v216 = vadd.f32 0.0, %v215
  %v217 = vpop.f32.mrb[0].mxu0
  %v218 = vpop.f32.mrb[0].mxu0
  %v219 = vadd.f32 0.0, %v218
  %v220 = vpop.f32.mrb[0].mxu0
  %221 = vmatprep.mubr.bf16.mxu0 0
  %222 = vmatmul.mubr.bf16.gmra.mrb[0].mxu0 %v90
  %v223 = vpop.f32.mrb[0].mxu0
  %v224 = vadd.f32 0.0, %v223
  %v225 = vpop.f32.mrb[0].mxu0
  %v226 = vpop.f32.mrb[0].mxu0
  %v227 = vadd.f32 0.0, %v226
  %v228 = vpop.f32.mrb[0].mxu0
  %229 = vmatprep.mubr.bf16.mxu0 0
  %230 = vmatmul.mubr.bf16.gmra.mrb[0].mxu0 %v91
  %v231 = vpop.f32.mrb[0].mxu0
  %v232 = vadd.f32 0.0, %v231
  %v233 = vpop.f32.mrb[0].mxu0
  %v234 = vpop.f32.mrb[0].mxu0
  %v235 = vadd.f32 0.0, %v234
  %v236 = vpop.f32.mrb[0].mxu0
  %237 = vmatprep.mubr.bf16.mxu0 0
  %238 = vmatmul.mubr.bf16.gmra.mrb[0].mxu0 %v92
  %v239 = vpop.f32.mrb[0].mxu0
  %v240 = vadd.f32 0.0, %v239
  %v241 = vpop.f32.mrb[0].mxu0
  %v242 = vpop.f32.mrb[0].mxu0
  %v243 = vadd.f32 0.0, %v242
  %v244 = vpop.f32.mrb[0].mxu0
  %245 = vdwg.mxu0
  %246 = vst [vmem:[%s2] sm:$0xff] %v184
  %247 = vst [vmem:[%s2 + $0x8] sm:$0xff] %v187
  %248 = vst [vmem:[%s2 + $0x10] sm:$0xff] %v192
  %249 = vst [vmem:[%s2 + $0x18] sm:$0xff] %v195
  %250 = vst [vmem:[%s2 + $0x20] sm:$0xff] %v200
  %251 = vst [vmem:[%s2 + $0x28] sm:$0xff] %v203
  %252 = vst [vmem:[%s2 + $0x30] sm:$0xff] %v208
  %253 = vst [vmem:[%s2 + $0x38] sm:$0xff] %v211
  %254 = vst [vmem:[%s2 + $0x40] sm:$0xff] %v216
  %255 = vst [vmem:[%s2 + $0x48] sm:$0xff] %v219
  %256 = vst [vmem:[%s2 + $0x50] sm:$0xff] %v224
  %257 = vst [vmem:[%s2 + $0x58] sm:$0xff] %v227
  %258 = vst [vmem:[%s2 + $0x60] sm:$0xff] %v232
  %259 = vst [vmem:[%s2 + $0x68] sm:$0xff] %v235
  %260 = vst [vmem:[%s2 + $0x70] sm:$0xff] %v240
  %261 = vst [vmem:[%s2 + $0x78] sm:$0xff] %v243
  %v262 = vld [vmem:[%s3] sm:$0x1]
  %v263 = vadd.f32 %v184, %v187
  %v264 = vadd.f32 %v263, %v192
  %v265 = vadd.f32 %v264, %v195
  %v266 = vadd.f32 %v265, %v200
  %v267 = vadd.f32 %v266, %v203
  %v268 = vadd.f32 %v267, %v208
  %v269 = vadd.f32 %v268, %v211
  %v270 = vadd.f32 %v269, %v216
  %v271 = vadd.f32 %v270, %v219
  %v272 = vadd.f32 %v271, %v224
  %v273 = vadd.f32 %v272, %v227
  %v274 = vadd.f32 %v273, %v232
  %v275 = vadd.f32 %v274, %v235
  %v276 = vadd.f32 %v275, %v240
  %v277 = vadd.f32 %v276, %v243
  %v278 = vrot.slane %v277, 4
  %v279 = vadd.f32 %v277, %v278
  %v280 = vrot.slane %v279, 2
  %v281 = vadd.f32 %v279, %v280
  %v282 = vrot.slane %v281, 1
  %v283 = vadd.f32 %v281, %v282
  %v284 = vadd.f32 %v262, %v283
  %285 = vst [vmem:[%s3] sm:$0x1] %v284
  %v286 = vld [vmem:[%s4] sm:$0x1]
  %v287 = vmul.f32 %v184, %v184
  %v288 = vmul.f32 %v187, %v187
  %v289 = vmul.f32 %v192, %v192
  %v290 = vmul.f32 %v195, %v195
  %v291 = vmul.f32 %v200, %v200
  %v292 = vmul.f32 %v203, %v203
  %v293 = vmul.f32 %v208, %v208
  %v294 = vmul.f32 %v211, %v211
  %v295 = vmul.f32 %v216, %v216
  %v296 = vmul.f32 %v219, %v219
  %v297 = vmul.f32 %v224, %v224
  %v298 = vmul.f32 %v227, %v227
  %v299 = vmul.f32 %v232, %v232
  %v300 = vmul.f32 %v235, %v235
  %v301 = vmul.f32 %v240, %v240
  %v302 = vmul.f32 %v243, %v243
  %v303 = vadd.f32 %v287, %v288
  %v304 = vadd.f32 %v303, %v289
  %v305 = vadd.f32 %v304, %v290
  %v306 = vadd.f32 %v305, %v291
  %v307 = vadd.f32 %v306, %v292
  %v308 = vadd.f32 %v307, %v293
  %v309 = vadd.f32 %v308, %v294
  %v310 = vadd.f32 %v309, %v295
  %v311 = vadd.f32 %v310, %v296
  %v312 = vadd.f32 %v311, %v297
  %v313 = vadd.f32 %v312, %v298
  %v314 = vadd.f32 %v313, %v299
  %v315 = vadd.f32 %v314, %v300
  %v316 = vadd.f32 %v315, %v301
  %v317 = vadd.f32 %v316, %v302
  %v318 = vrot.slane %v317, 4
  %v319 = vadd.f32 %v317, %v318
  %v320 = vrot.slane %v319, 2
  %v321 = vadd.f32 %v319, %v320
  %v322 = vrot.slane %v321, 1
  %v323 = vadd.f32 %v321, %v322
  %v324 = vadd.f32 %v286, %v323
  %325 = vst [vmem:[%s4] sm:$0x1] %v324
  // Predicated region
  $region14: #{basic_block_forward.4} parent=0 // pred_check
    _
  $region15: #{basic_block_forward.4} parent=0 // pred_check_branch
    %327 = sbr.rel (0) target = $region17
  $region16: #{basic_block_forward.4} parent=0 // pred_region
    _
  $region17: #{basic_block_forward.4} parent=0 // pred_fallthru
    _
  // Predicated region
  $region18: #{basic_block_forward.4} parent=0 // pred_check
    _
  $region19: #{basic_block_forward.4} parent=0 // pred_check_branch
    %329 = sbr.rel (0) target = $region21
  $region20: #{basic_block_forward.4} parent=0 // pred_region
    _
  $region21: #{basic_block_forward.4} parent=0 // pred_fallthru
    _
  // Predicated region
  $region22: #{basic_block_forward.4} parent=0 // pred_check
    _
  $region23: #{basic_block_forward.4} parent=0 // pred_check_branch
    %331 = sbr.rel (0) target = $region25
  $region24: #{basic_block_forward.4} parent=0 // pred_region
    _
  $region25: #{basic_block_forward.4} parent=0 // pred_fallthru
    _
  // Predicated region
  $region26: #{basic_block_forward.4} parent=0 // pred_check
    _
  $region27: #{basic_block_forward.4} parent=0 // pred_check_branch
    %333 = sbr.rel (0) target = $region29
  $region28: #{basic_block_forward.4} parent=0 // pred_region
    _
  $region29: #{basic_block_forward.4} parent=0 // pred_fallthru
    _
  // Predicated region
  $region30: #{basic_block_forward.4} parent=0 // pred_check
    _
  $region31: #{basic_block_forward.4} parent=0 // pred_check_branch
    %335 = sbr.rel (0) target = $region33
  $region32: #{basic_block_forward.4} parent=0 // pred_region
    _
  $region33: #{basic_block_forward.4} parent=0 // pred_fallthru
    _
  // Predicated region
  $region34: #{basic_block_forward.4} parent=0 // pred_check
    _
  $region35: #{basic_block_forward.4} parent=0 // pred_check_branch
    %337 = sbr.rel (0) target = $region37
  $region36: #{basic_block_forward.4} parent=0 // pred_region
    _
  $region37: #{basic_block_forward.4} parent=0 // pred_fallthru
    _

// kernel: basic_block_forward.7
$region0: #{basic_block_forward.7}
  #allocation0 [shape = 'u32[]', space=smem, size = 0x4, offset = 0x4, fixed_abs, tag = 'smem constant byte address 0x4 - core index']
  #allocation1 [shape = 'u32[144,128]{1,0:T(1,128)}', space=vmem, size = 0x12000, scoped, tag = 'internal scratch']
  %s0 = inlined_call_operand.vmem [shape: f32[128,128], index: 0, kind: input, shape index: {}]
  %s1 = inlined_call_operand.vmem [shape: f32[1,128], index: 1, kind: input, shape index: {}]
  %s2 = inlined_call_operand.vmem [shape: f32[1,128], index: 2, kind: input, shape index: {}]
  %s3 = inlined_call_operand.vmem [shape: f32[128,128], index: 3, kind: input, shape index: {}]
  %s4 = inlined_call_operand.vmem [shape: f32[128,128], index: 4, kind: output, shape index: {}]
  %s5 = sld [smem:[#allocation0]]
  $region26: #{basic_block_forward.7} parent=0
    _
  %s7 = ssub.s32 1, %s5
  %s8 = scalar_select 0, %s7, %s5
  // Predicated region
  $region2: #{basic_block_forward.7} parent=0 // pred_check
    _
  $region3: #{basic_block_forward.7} parent=0 // pred_check_branch
    %10 = sbr.rel (0) target = $region5
  $region4: #{basic_block_forward.7} parent=0 // pred_region
    _
  $region5: #{basic_block_forward.7} parent=0 // pred_fallthru
    _
  // Predicated region
  $region6: #{basic_block_forward.7} parent=0 // pred_check
    _
  $region7: #{basic_block_forward.7} parent=0 // pred_check_branch
    %12 = sbr.rel (0) target = $region9
  $region8: #{basic_block_forward.7} parent=0 // pred_region
    _
  $region9: #{basic_block_forward.7} parent=0 // pred_fallthru
    _
  // Predicated region
  $region10: #{basic_block_forward.7} parent=0 // pred_check
    _
  $region11: #{basic_block_forward.7} parent=0 // pred_check_branch
    %14 = sbr.rel (0) target = $region13
  $region12: #{basic_block_forward.7} parent=0 // pred_region
    _
  $region13: #{basic_block_forward.7} parent=0 // pred_fallthru
    _
  // Predicated region
  $region14: #{basic_block_forward.7} parent=0 // pred_check
    _
  $region15: #{basic_block_forward.7} parent=0 // pred_check_branch
    %16 = sbr.rel (0) target = $region17
  $region16: #{basic_block_forward.7} parent=0 // pred_region
    _
  $region17: #{basic_block_forward.7} parent=0 // pred_fallthru
    _
  %v17 = vld [vmem:[%s0] sm:$0xff]
  %v18 = vld [vmem:[%s0 + $0x8] sm:$0xff]
  %v19 = vld [vmem:[%s0 + $0x10] sm:$0xff]
  %v20 = vld [vmem:[%s0 + $0x18] sm:$0xff]
  %v21 = vld [vmem:[%s0 + $0x20] sm:$0xff]
  %v22 = vld [vmem:[%s0 + $0x28] sm:$0xff]
  %v23 = vld [vmem:[%s0 + $0x30] sm:$0xff]
  %v24 = vld [vmem:[%s0 + $0x38] sm:$0xff]
  %v25 = vld [vmem:[%s0 + $0x40] sm:$0xff]
  %v26 = vld [vmem:[%s0 + $0x48] sm:$0xff]
  %v27 = vld [vmem:[%s0 + $0x50] sm:$0xff]
  %v28 = vld [vmem:[%s0 + $0x58] sm:$0xff]
  %v29 = vld [vmem:[%s0 + $0x60] sm:$0xff]
  %v30 = vld [vmem:[%s0 + $0x68] sm:$0xff]
  %v31 = vld [vmem:[%s0 + $0x70] sm:$0xff]
  %v32 = vld [vmem:[%s0 + $0x78] sm:$0xff]
  %v33 = vld [vmem:[%s1] sm:$0x1]
  %v35 = vlaneseq
  %v36 = vshrl.u32 %v35, 7
  %v37 = vsub.s32 0, %v36
  %v38 = vrot.slane %v33, %v37
  %v40 = vmul.f32 %v17, %v38
  %v41 = vmul.f32 %v18, %v38
  %v42 = vmul.f32 %v19, %v38
  %v43 = vmul.f32 %v20, %v38
  %v44 = vmul.f32 %v21, %v38
  %v45 = vmul.f32 %v22, %v38
  %v46 = vmul.f32 %v23, %v38
  %v47 = vmul.f32 %v24, %v38
  %v48 = vmul.f32 %v25, %v38
  %v49 = vmul.f32 %v26, %v38
  %v50 = vmul.f32 %v27, %v38
  %v51 = vmul.f32 %v28, %v38
  %v52 = vmul.f32 %v29, %v38
  %v53 = vmul.f32 %v30, %v38
  %v54 = vmul.f32 %v31, %v38
  %v55 = vmul.f32 %v32, %v38
  %v56 = vld [vmem:[%s2] sm:$0x1]
  %v58 = vlaneseq
  %v59 = vshrl.u32 %v58, 7
  %v60 = vsub.s32 0, %v59
  %v61 = vrot.slane %v56, %v60
  %v63 = vadd.f32 %v40, %v61
  %v64 = vadd.f32 %v41, %v61
  %v65 = vadd.f32 %v42, %v61
  %v66 = vadd.f32 %v43, %v61
  %v67 = vadd.f32 %v44, %v61
  %v68 = vadd.f32 %v45, %v61
  %v69 = vadd.f32 %v46, %v61
  %v70 = vadd.f32 %v47, %v61
  %v71 = vadd.f32 %v48, %v61
  %v72 = vadd.f32 %v49, %v61
  %v73 = vadd.f32 %v50, %v61
  %v74 = vadd.f32 %v51, %v61
  %v75 = vadd.f32 %v52, %v61
  %v76 = vadd.f32 %v53, %v61
  %v77 = vadd.f32 %v54, %v61
  %v78 = vadd.f32 %v55, %v61
  %v79 = vld [vmem:[%s3] sm:$0xff]
  %v80 = vld [vmem:[%s3 + $0x8] sm:$0xff]
  %v81 = vld [vmem:[%s3 + $0x10] sm:$0xff]
  %v82 = vld [vmem:[%s3 + $0x18] sm:$0xff]
  %v83 = vld [vmem:[%s3 + $0x20] sm:$0xff]
  %v84 = vld [vmem:[%s3 + $0x28] sm:$0xff]
  %v85 = vld [vmem:[%s3 + $0x30] sm:$0xff]
  %v86 = vld [vmem:[%s3 + $0x38] sm:$0xff]
  %v87 = vld [vmem:[%s3 + $0x40] sm:$0xff]
  %v88 = vld [vmem:[%s3 + $0x48] sm:$0xff]
  %v89 = vld [vmem:[%s3 + $0x50] sm:$0xff]
  %v90 = vld [vmem:[%s3 + $0x58] sm:$0xff]
  %v91 = vld [vmem:[%s3 + $0x60] sm:$0xff]
  %v92 = vld [vmem:[%s3 + $0x68] sm:$0xff]
  %v93 = vld [vmem:[%s3 + $0x70] sm:$0xff]
  %v94 = vld [vmem:[%s3 + $0x78] sm:$0xff]
  %v95 = vadd.f32 %v63, %v79
  %v96 = vadd.f32 %v64, %v80
  %v97 = vadd.f32 %v65, %v81
  %v98 = vadd.f32 %v66, %v82
  %v99 = vadd.f32 %v67, %v83
  %v100 = vadd.f32 %v68, %v84
  %v101 = vadd.f32 %v69, %v85
  %v102 = vadd.f32 %v70, %v86
  %v103 = vadd.f32 %v71, %v87
  %v104 = vadd.f32 %v72, %v88
  %v105 = vadd.f32 %v73, %v89
  %v106 = vadd.f32 %v74, %v90
  %v107 = vadd.f32 %v75, %v91
  %v108 = vadd.f32 %v76, %v92
  %v109 = vadd.f32 %v77, %v93
  %v110 = vadd.f32 %v78, %v94
  %v111 = vmax.f32 %v95, 0.0
  %v112 = vmax.f32 %v96, 0.0
  %v113 = vmax.f32 %v97, 0.0
  %v114 = vmax.f32 %v98, 0.0
  %v115 = vmax.f32 %v99, 0.0
  %v116 = vmax.f32 %v100, 0.0
  %v117 = vmax.f32 %v101, 0.0
  %v118 = vmax.f32 %v102, 0.0
  %v119 = vmax.f32 %v103, 0.0
  %v120 = vmax.f32 %v104, 0.0
  %v121 = vmax.f32 %v105, 0.0
  %v122 = vmax.f32 %v106, 0.0
  %v123 = vmax.f32 %v107, 0.0
  %v124 = vmax.f32 %v108, 0.0
  %v125 = vmax.f32 %v109, 0.0
  %v126 = vmax.f32 %v110, 0.0
  %127 = vst [vmem:[%s4] sm:$0xff] %v111
  %128 = vst [vmem:[%s4 + $0x8] sm:$0xff] %v112
  %129 = vst [vmem:[%s4 + $0x10] sm:$0xff] %v113
  %130 = vst [vmem:[%s4 + $0x18] sm:$0xff] %v114
  %131 = vst [vmem:[%s4 + $0x20] sm:$0xff] %v115
  %132 = vst [vmem:[%s4 + $0x28] sm:$0xff] %v116
  %133 = vst [vmem:[%s4 + $0x30] sm:$0xff] %v117
  %134 = vst [vmem:[%s4 + $0x38] sm:$0xff] %v118
  %135 = vst [vmem:[%s4 + $0x40] sm:$0xff] %v119
  %136 = vst [vmem:[%s4 + $0x48] sm:$0xff] %v120
  %137 = vst [vmem:[%s4 + $0x50] sm:$0xff] %v121
  %138 = vst [vmem:[%s4 + $0x58] sm:$0xff] %v122
  %139 = vst [vmem:[%s4 + $0x60] sm:$0xff] %v123
  %140 = vst [vmem:[%s4 + $0x68] sm:$0xff] %v124
  %141 = vst [vmem:[%s4 + $0x70] sm:$0xff] %v125
  %142 = vst [vmem:[%s4 + $0x78] sm:$0xff] %v126
  // Predicated region
  $region18: #{basic_block_forward.7} parent=0 // pred_check
    _
  $region19: #{basic_block_forward.7} parent=0 // pred_check_branch
    %144 = sbr.rel (0) target = $region21
  $region20: #{basic_block_forward.7} parent=0 // pred_region
    _
  $region21: #{basic_block_forward.7} parent=0 // pred_fallthru
    _
  // Predicated region
  $region22: #{basic_block_forward.7} parent=0 // pred_check
    _
  $region23: #{basic_block_forward.7} parent=0 // pred_check_branch
    %146 = sbr.rel (0) target = $region25
  $region24: #{basic_block_forward.7} parent=0 // pred_region
    _
  $region25: #{basic_block_forward.7} parent=0 // pred_fallthru
    _

</llo_original>
